<compile_context>
chip_gen: v6e
topology: v6e:2x2x1
jax: 0.10.0
libtpu: 0.0.40
codegen_flags: <defaults>
</compile_context>

<pallas_src>
import functools
import math

import jax
import jax.numpy as jnp
from jax.experimental import pallas as pl
from jax.experimental.pallas import tpu as pltpu

_LANES = 128


# ---------------------------------------------------------------------------
# Pallas kernel: y = x @ w + b, tiled over the row (pixel) axis M.
# ---------------------------------------------------------------------------
def _matmul_bias_kernel(x_ref, w_ref, b_ref, o_ref):
    # Cast the activation tile to bf16 in VMEM (VPU, hidden under DMA/MXU)
    # instead of materialising a bf16 copy of x in HBM.
    x_bf = x_ref[...].astype(jnp.bfloat16)
    acc = jnp.dot(x_bf, w_ref[...], preferred_element_type=jnp.float32)
    o_ref[...] = (acc + b_ref[...]).astype(o_ref.dtype)


def _choose_tm(M, K, N_pad, vmem_budget_bytes=40 * 1024 * 1024):
    """Largest sublane-aligned M tile that keeps double-buffered traffic in budget."""
    per_row = 2 * (K * 4) + 2 * (N_pad * 4)      # f32 x tile + f32 out tile, 2x buffered
    resident = K * N_pad * 2 + N_pad * 4         # bf16 weights + f32 bias stay resident
    tm = (vmem_budget_bytes - resident) // max(per_row, 1)
    tm = int(min(max(tm, 8), 1024))              # ~512-1024 rows is the roofline sweet spot
    return max(8, (tm // 8) * 8)


def matmul_bias(x, w, b, tm=None):
    """x: (M, K) f32, w: (K, N) f32, b: (N,) f32  ->  (M, N) f32 via the MXU."""
    M, K = x.shape
    K2, N = w.shape
    assert K == K2

    # Pad the output columns to a multiple of 128 lanes: full-width unmasked
    # stores and a full MXU tile.  (For realistic ViT sizes N is already a
    # multiple of 128 and this is a no-op.)
    N_pad = ((N + _LANES - 1) // _LANES) * _LANES
    if N_pad != N:
        w = jnp.pad(w, ((0, 0), (0, N_pad - N)))
        b = jnp.pad(b, ((0, N_pad - N),))

    if tm is None:
        tm = _choose_tm(M, K, N_pad)
    tm = min(tm, M)
    if tm < M:
        tm = max(8, (tm // 8) * 8)               # sublane-aligned; ragged edge is fine

    w_bf = w.astype(jnp.bfloat16)                # tiny, VMEM-resident
    b2 = b.reshape(1, N_pad).astype(jnp.float32)

    cost = pl.CostEstimate(
        flops=2 * M * K * N_pad,
        transcendentals=0,
        bytes_accessed=M * K * 4 + K * N_pad * 2 + N_pad * 4 + M * N_pad * 4,
    )
    y = pl.pallas_call(
        _matmul_bias_kernel,
        out_shape=jax.ShapeDtypeStruct((M, N_pad), jnp.float32),
        grid=(pl.cdiv(M, tm),),
        in_specs=[
            pl.BlockSpec((tm, K), lambda i: (i, 0)),       # x tile: streamed over M
            pl.BlockSpec((K, N_pad), lambda i: (0, 0)),    # weights: VMEM-resident
            pl.BlockSpec((1, N_pad), lambda i: (0, 0)),    # bias:    VMEM-resident
        ],
        out_specs=pl.BlockSpec((tm, N_pad), lambda i: (i, 0)),
        compiler_params=pltpu.CompilerParams(
            dimension_semantics=("parallel",),              # megacore-shardable (v7x)
            vmem_limit_bytes=64 * 1024 * 1024,
        ),
        cost_estimate=cost,
    )(x, w_bf, b2)
    if N_pad != N:
        y = y[:, :N]                             # fused by XLA into the unshuffle copy
    return y


# ---------------------------------------------------------------------------
# Parameter construction (deterministic, PyTorch-shaped)
# ---------------------------------------------------------------------------
def init_params(key, patch_size, embed_dim):
    num_layers = int(math.log2(patch_size))
    params = {"deconv": [], "num_layers": num_layers}
    for i in range(num_layers):
        c_in = embed_dim // (2 ** i)
        c_out = embed_dim // (2 ** (i + 1))
        key, kw, kb = jax.random.split(key, 3)
        bound = 1.0 / math.sqrt(c_in * 2 * 2)
        # PyTorch ConvTranspose2d weight shape: (C_in, C_out, kH, kW)
        w = jax.random.uniform(kw, (c_in, c_out, 2, 2), jnp.float32, -bound, bound)
        b = jax.random.uniform(kb, (c_out,), jnp.float32, -bound, bound)
        params["deconv"].append((w, b))
    c_in = embed_dim // (2 ** num_layers)
    key, kw, kb = jax.random.split(key, 3)
    bound = 1.0 / math.sqrt(c_in)
    # PyTorch Conv2d weight shape: (3, C_in, 1, 1)
    w = jax.random.uniform(kw, (3, c_in, 1, 1), jnp.float32, -bound, bound)
    b = jax.random.uniform(kb, (3,), jnp.float32, -bound, bound)
    params["final"] = (w, b)
    return params


# ---------------------------------------------------------------------------
# Exact offline composition: deconv stack + 1x1 conv  ->  one (E, 3*P*P) map.
# ---------------------------------------------------------------------------
def compose_params(params):
    """Returns (W_mat, b_vec, P) with column index = k*P*P + u*P + v, where the
    output block of an input pixel is out[k, u, v] = x @ W_mat + b_vec."""
    if params["deconv"]:
        E = params["deconv"][0][0].shape[0]
    else:
        E = params["final"][0].shape[1]
    A = jnp.eye(E, dtype=jnp.float32).reshape(E, E, 1, 1)   # (E, C, P, P)
    Bv = jnp.zeros((E, 1, 1), jnp.float32)                  # (C, P, P)
    P = 1
    for (w, b) in params["deconv"]:
        c_in, c_out, _, _ = w.shape
        # A'[e, o, 2u+i, 2v+j] = sum_c A[e, c, u, v] * w[c, o, i, j]
        A = jnp.einsum("ecuv,coij->eouivj", A, w).reshape(E, c_out, 2 * P, 2 * P)
        Bv = (jnp.einsum("cuv,coij->ouivj", Bv, w).reshape(c_out, 2 * P, 2 * P)
              + b[:, None, None])
        P *= 2
    wf, bf = params["final"]
    wf2 = wf.reshape(wf.shape[0], wf.shape[1])               # (3, C)
    A = jnp.einsum("ecuv,kc->ekuv", A, wf2)                  # (E, 3, P, P)
    Bv = jnp.einsum("cuv,kc->kuv", Bv, wf2) + bf[:, None, None]
    return A.reshape(E, 3 * P * P), Bv.reshape(3 * P * P), P


# ---------------------------------------------------------------------------
# Forward pass
# ---------------------------------------------------------------------------
def unpatch_embedding_forward(x, params, tm=None):
    """x: (B, num_patches, embed_dim) -> image (B, 3, H*P, W*P), NCHW like PyTorch."""
    B, Np, E = x.shape
    H = W = int(round(Np ** 0.5))
    W_mat, b_vec, P = compose_params(params)        # constant-folded under jit
    xf = x.reshape(B * H * W, E)                    # per-pixel embedding rows
    y = matmul_bias(xf, W_mat, b_vec, tm=tm)        # (B*H*W, 3*P*P)  -- Pallas
    y = y.reshape(B, H, W, 3, P, P)
    y = y.transpose(0, 3, 1, 4, 2, 5)               # (B, 3, H, P, W, P)
    return y.reshape(B, 3, H * P, W * P)            # NCHW, matches PyTorch


# Plain-JAX layer-by-layer reference (f32) for a numerical sanity check.
def unpatch_embedding_reference(x, params):
    B, Np, E = x.shape
    H = W = int(round(Np ** 0.5))
    feat = x.reshape(B, H, W, E).astype(jnp.float32)
    for (w, b) in params["deconv"]:
        c_in, c_out, _, _ = w.shape
        y = jnp.einsum("bhwc,coij->bhiwjo", feat, w) + b
        H, W = 2 * H, 2 * W
        feat = y.reshape(B, H, W, c_out)
    wf, bf = params["final"]
    y = jnp.einsum("bhwc,kc->bhwk", feat, wf.reshape(wf.shape[0], wf.shape[1])) + bf
    return y.transpose(0, 3, 1, 2)


if __name__ == "__main__":
    # patch_size=4 -> 2 deconv layers; 8x8 grid of patches -> 32x32 output image.
    patch_size = 4
    embed_dim = 32
    batch = 2
    num_patches = 64

    key = jax.random.PRNGKey(0)
    key, kx, kp = jax.random.split(key, 3)
    x = jax.random.normal(kx, (batch, num_patches, embed_dim), jnp.float32)
    params = init_params(kp, patch_size, embed_dim)

    # tm=64 forces a multi-step grid (M = 128) so the tiled pipeline is exercised.
    fwd = jax.jit(functools.partial(unpatch_embedding_forward, params=params, tm=64))
    image = jax.block_until_ready(fwd(x))

    expected_hw = int(round(num_patches ** 0.5)) * patch_size
    assert image.shape == (batch, 3, expected_hw, expected_hw), image.shape

    ref = jax.block_until_ready(unpatch_embedding_reference(x, params))
    err = float(jnp.max(jnp.abs(image - ref)))
    assert jnp.allclose(image, ref, atol=3e-2, rtol=3e-2), err

    print("KERNEL_OK")
</pallas_src>

<mosaic_0001>
module attributes {stable_mosaic.version = 11 : i64} {
  func.func @_matmul_bias_kernel(%arg0: i32, %arg1: memref<64x32xf32, #tpu.memory_space<vmem>>, %arg2: memref<32x128xbf16, #tpu.memory_space<vmem>>, %arg3: memref<1x128xf32, #tpu.memory_space<vmem>>, %arg4: memref<64x128xf32, #tpu.memory_space<vmem>>) attributes {dimension_semantics = [#tpu.dimension_semantics<parallel>], iteration_bounds = array<i64: 2>, scalar_prefetch = 0 : i64, scratch_operands = 0 : i64, tpu.core_type = #tpu.core_type<tc>, window_params = [{transform_indices = @transform_0, window_bounds = array<i64: 64, 32>}, {pipeline_mode = #tpu.pipeline_mode<synchronous>, transform_indices = @transform_1, window_bounds = array<i64: 32, 128>}, {pipeline_mode = #tpu.pipeline_mode<synchronous>, transform_indices = @transform_2, window_bounds = array<i64: 1, 128>}, {transform_indices = @transform_3, window_bounds = array<i64: 64, 128>}]} {
    %c0 = arith.constant 0 : index
    %c0_0 = arith.constant 0 : index
    %0 = vector.load %arg1[%c0, %c0_0] : memref<64x32xf32, #tpu.memory_space<vmem>>, vector<64x32xf32>
    %1 = arith.truncf %0 : vector<64x32xf32> to vector<64x32xbf16>
    %c0_1 = arith.constant 0 : index
    %c0_2 = arith.constant 0 : index
    %2 = vector.load %arg2[%c0_1, %c0_2] : memref<32x128xbf16, #tpu.memory_space<vmem>>, vector<32x128xbf16>
    %cst = arith.constant dense<0.000000e+00> : vector<64x128xf32>
    %3 = tpu.matmul %1, %2, %cst {dimension_numbers = #tpu.dot_dimension_numbers<[1], [0], [0], [1], [0, 0, 1, 1], [], []>} : vector<64x32xbf16>, vector<32x128xbf16>, vector<64x128xf32> -> vector<64x128xf32>
    %c0_3 = arith.constant 0 : index
    %c0_4 = arith.constant 0 : index
    %4 = vector.load %arg3[%c0_3, %c0_4] : memref<1x128xf32, #tpu.memory_space<vmem>>, vector<1x128xf32>
    %5 = vector.broadcast %4 : vector<1x128xf32> to vector<64x128xf32>
    %6 = arith.addf %3, %5 : vector<64x128xf32>
    %c0_5 = arith.constant 0 : index
    %c0_6 = arith.constant 0 : index
    %7 = vector.load %arg4[%c0_5, %c0_6] : memref<64x128xf32, #tpu.memory_space<vmem>>, vector<64x128xf32>
    tpu.vector_store %arg4[%c0_5, %c0_6], %6 {strides = array<i32>} : memref<64x128xf32, #tpu.memory_space<vmem>>, vector<64x128xf32>,
    return
  }
  func.func @transform_0(%arg0: i32) -> (i32, i32) {
    %c0_i32 = arith.constant 0 : i32
    %c0_i32_0 = arith.constant 0 : i32
    return %arg0, %c0_i32 : i32, i32
  }
  func.func @transform_1(%arg0: i32) -> (i32, i32) {
    %c0_i32 = arith.constant 0 : i32
    %c0_i32_0 = arith.constant 0 : i32
    %c0_i32_1 = arith.constant 0 : i32
    return %c0_i32, %c0_i32_0 : i32, i32
  }
  func.func @transform_2(%arg0: i32) -> (i32, i32) {
    %c0_i32 = arith.constant 0 : i32
    %c0_i32_0 = arith.constant 0 : i32
    %c0_i32_1 = arith.constant 0 : i32
    return %c0_i32, %c0_i32_0 : i32, i32
  }
  func.func @transform_3(%arg0: i32) -> (i32, i32) {
    %c0_i32 = arith.constant 0 : i32
    %c0_i32_0 = arith.constant 0 : i32
    return %arg0, %c0_i32 : i32, i32
  }
}

</mosaic_0001>

<llo_original>
// kernel: unpatch_embedding_forward.1
$region0: #{unpatch_embedding_forward.1}
  #allocation0 [shape = 'u32[]', space=smem, size = 0x4, offset = 0x4, fixed_abs, tag = 'smem constant byte address 0x4 - core index']
  #allocation1 [shape = 'u32[144,128]{1,0:T(1,128)}', space=vmem, size = 0x12000, scoped, tag = 'internal scratch']
  %s0 = inlined_call_operand.vmem [shape: f32[128,32], index: 0, kind: input, shape index: {}]
  %s1 = inlined_call_operand.vmem [shape: bf16[32,128], index: 1, kind: input, shape index: {}]
  %s2 = inlined_call_operand.vmem [shape: f32[1,128], index: 2, kind: input, shape index: {}]
  %s3 = inlined_call_operand.vmem [shape: f32[128,128], index: 3, kind: output, shape index: {}]
  %s4 = sld [smem:[#allocation0]]
  $region45: #{unpatch_embedding_forward.1} parent=0
    _
  %s6 = ssub.s32 1, %s4
  %s7 = scalar_select 0, %s6, %s4
  loop: start=0, step=1, limit=4
  $region2: #{unpatch_embedding_forward.1} parent=0 // loop_pre_header
    _
  $region3: #{unpatch_embedding_forward.1} parent=0 // loop_header
    %s9 = sphi 0, %s13
    %p10 = scmp.ge.s32.totalorder %s9, 4
    %s19 = sphi 0, %s21
    %s22 = sphi 0, %s19
    %s23 = sphi 0, %s22
    %s39 = sphi 0, %s23
    %s43 = sphi 0, %s43
    %s45 = sphi 0, %s43
    %s46 = sphi 0, %s45
    %s60 = sphi 0, %s46
    %s64 = sphi 0, %s64
    %s66 = sphi 0, %s64
    %s67 = sphi 0, %s66
    %s81 = sphi 0, %s67
    %s87 = sphi 0, %s89
    %s90 = sphi 0, %s87
    %s91 = sphi 0, %s90
    %s107 = sphi 0, %s91
  $region4: #{unpatch_embedding_forward.1} parent=0 // loop_header_branch
    %12 = sbr.rel (%p10) target = $region8
  $region5: #{unpatch_embedding_forward.1} parent=0 // loop_body
    %s14 = ssub.s32 %s9, 1
    %s15 = ssub.s32 %s9, 2
    %s16 = sadd.s32 %s9, 1
    %s17 = ssub.s32 %s9, %s16
    %p18 = scmp.eq.s32.totalorder %s17, 0
    %s20 = sadd.s32 %s19, 1
    %s21 = scalar_select %p18, %s19, %s20
    %p24 = pneg %p18
    %p25 = scmp.eq.s32.totalorder %s9, 1
    %p26 = por %p24, %p25
    %p27 = scmp.ne.s32.totalorder %s19, %s22
    %p28 = scmp.eq.s32.totalorder %s9, 0
    %p29 = por %p27, %p28
    %p30 = scmp.ne.s32.totalorder %s19, %s22
    %p31 = scmp.eq.s32.totalorder %s14, 1
    %p32 = por %p30, %p31
    %p33 = scmp.ne.s32.totalorder %s22, %s23
    %p34 = scmp.eq.s32.totalorder %s14, 0
    %p35 = por %p33, %p34
    %p36 = scmp.ne.s32.totalorder %s22, %s23
    %p37 = scmp.eq.s32.totalorder %s15, 1
    %p38 = por %p36, %p37
    %p40 = scmp.ne.s32.totalorder %s23, %s39
    %p41 = scmp.eq.s32.totalorder %s15, 0
    %p42 = por %p40, %p41
    %s44 = sadd.s32 %s43, 1
    %p47 = scmp.eq.s32.totalorder %s9, 1
    %p48 = scmp.ne.s32.totalorder %s43, %s45
    %p49 = scmp.eq.s32.totalorder %s9, 0
    %p50 = por %p48, %p49
    %p51 = scmp.ne.s32.totalorder %s43, %s45
    %p52 = scmp.eq.s32.totalorder %s14, 1
    %p53 = por %p51, %p52
    %p54 = scmp.ne.s32.totalorder %s45, %s46
    %p55 = scmp.eq.s32.totalorder %s14, 0
    %p56 = por %p54, %p55
    %p57 = scmp.ne.s32.totalorder %s45, %s46
    %p58 = scmp.eq.s32.totalorder %s15, 1
    %p59 = por %p57, %p58
    %p61 = scmp.ne.s32.totalorder %s46, %s60
    %p62 = scmp.eq.s32.totalorder %s15, 0
    %p63 = por %p61, %p62
    %s65 = sadd.s32 %s64, 1
    %p68 = scmp.eq.s32.totalorder %s9, 1
    %p69 = scmp.ne.s32.totalorder %s64, %s66
    %p70 = scmp.eq.s32.totalorder %s9, 0
    %p71 = por %p69, %p70
    %p72 = scmp.ne.s32.totalorder %s64, %s66
    %p73 = scmp.eq.s32.totalorder %s14, 1
    %p74 = por %p72, %p73
    %p75 = scmp.ne.s32.totalorder %s66, %s67
    %p76 = scmp.eq.s32.totalorder %s14, 0
    %p77 = por %p75, %p76
    %p78 = scmp.ne.s32.totalorder %s66, %s67
    %p79 = scmp.eq.s32.totalorder %s15, 1
    %p80 = por %p78, %p79
    %p82 = scmp.ne.s32.totalorder %s67, %s81
    %p83 = scmp.eq.s32.totalorder %s15, 0
    %p84 = por %p82, %p83
    %s85 = ssub.s32 %s9, %s16
    %p86 = scmp.eq.s32.totalorder %s85, 0
    %s88 = sadd.s32 %s87, 1
    %s89 = scalar_select %p86, %s87, %s88
    %p92 = pneg %p86
    %p93 = scmp.eq.s32.totalorder %s9, 1
    %p94 = por %p92, %p93
    %p95 = scmp.ne.s32.totalorder %s87, %s90
    %p96 = scmp.eq.s32.totalorder %s9, 0
    %p97 = por %p95, %p96
    %p98 = scmp.ne.s32.totalorder %s87, %s90
    %p99 = scmp.eq.s32.totalorder %s14, 1
    %p100 = por %p98, %p99
    %p101 = scmp.ne.s32.totalorder %s90, %s91
    %p102 = scmp.eq.s32.totalorder %s14, 0
    %p103 = por %p101, %p102
    %p104 = scmp.ne.s32.totalorder %s90, %s91
    %p105 = scmp.eq.s32.totalorder %s15, 1
    %p106 = por %p104, %p105
    %p108 = scmp.ne.s32.totalorder %s91, %s107
    %p109 = scmp.eq.s32.totalorder %s15, 0
    %p110 = por %p108, %p109
    %p111 = scmp.le.s32.totalorder 1, %s9
    %p112 = scmp.lt.s32.totalorder %s9, 3
    %p113 = pnand %p111, %p112
    %p114 = pneg %p113
    // Predicated region
    $region9: #{unpatch_embedding_forward.1} parent=5 // pred_check
      _
    $region10: #{unpatch_embedding_forward.1} parent=5 // pred_check_branch
      %116 = sbr.rel (%p113) target = $region12
    $region11: #{unpatch_embedding_forward.1} parent=5 // pred_region
      %s117 = ssub.s32 %s9, 1
      // Predicated region
      $region13: #{unpatch_embedding_forward.1} parent=11 // pred_check
        %p118 = pneg %p56
      $region14: #{unpatch_embedding_forward.1} parent=11 // pred_check_branch
        %120 = sbr.rel (%p118) target = $region16
      $region15: #{unpatch_embedding_forward.1} parent=11 // pred_region
        _
      $region16: #{unpatch_embedding_forward.1} parent=11 // pred_fallthru
        _
      // Predicated region
      $region17: #{unpatch_embedding_forward.1} parent=11 // pred_check
        %p121 = pneg %p77
      $region18: #{unpatch_embedding_forward.1} parent=11 // pred_check_branch
        %123 = sbr.rel (%p121) target = $region20
      $region19: #{unpatch_embedding_forward.1} parent=11 // pred_region
        _
      $region20: #{unpatch_embedding_forward.1} parent=11 // pred_fallthru
        _
    $region12: #{unpatch_embedding_forward.1} parent=5 // pred_fallthru
      _
    %p124 = scmp.lt.s32.totalorder %s9, 2
    // Predicated region
    $region21: #{unpatch_embedding_forward.1} parent=5 // pred_check
      %p125 = pneg %p124
    $region22: #{unpatch_embedding_forward.1} parent=5 // pred_check_branch
      %127 = sbr.rel (%p125) target = $region24
    $region23: #{unpatch_embedding_forward.1} parent=5 // pred_region
      // Predicated region
      $region25: #{unpatch_embedding_forward.1} parent=23 // pred_check
        %p128 = pneg %p29
      $region26: #{unpatch_embedding_forward.1} parent=23 // pred_check_branch
        %130 = sbr.rel (%p128) target = $region28
      $region27: #{unpatch_embedding_forward.1} parent=23 // pred_region
        %s131 = smul.u32 8, %s9
        %p132 = scmp.lt.s32.totalorder %s131, 15
        %s133 = scalar_select %p132, %s131, 15
        %s134 = smul.addr %s133, 8
        %s135 = scalar_lea.vmem %s0, %s134
        %s136 = smul.u32 8, %s9
      $region28: #{unpatch_embedding_forward.1} parent=23 // pred_fallthru
        _
    $region24: #{unpatch_embedding_forward.1} parent=5 // pred_fallthru
      _
    %p137 = scmp.le.s32.totalorder 1, %s9
    %p138 = scmp.lt.s32.totalorder %s9, 3
    %p139 = pnand %p137, %p138
    %p140 = pneg %p139
    // Predicated region
    $region29: #{unpatch_embedding_forward.1} parent=5 // pred_check
      _
    $region30: #{unpatch_embedding_forward.1} parent=5 // pred_check_branch
      %142 = sbr.rel (%p139) target = $region32
    $region31: #{unpatch_embedding_forward.1} parent=5 // pred_region
      %s143 = ssub.s32 %s9, 1
      %s144 = smul.u32 8, %s14
      %p145 = scmp.lt.s32.totalorder %s144, 15
      %s146 = scalar_select %p145, %s144, 15
      %s147 = smul.addr %s146, 8
      %s148 = scalar_lea.vmem %s0, %s147
      %p149 = pneg %p35
      %p150 = pneg %p32
      %p151 = pneg %p56
      %p152 = pneg %p53
      %p153 = pneg %p77
      %p154 = pneg %p74
      %p155 = pneg %p103
      %p156 = pneg %p100
      %s157 = smul.u32 8, %s14
      %p158 = scmp.lt.s32.totalorder %s157, 15
      %s159 = scalar_select %p158, %s157, 15
      %s160 = smul.addr %s159, 8
      %s161 = scalar_lea.vmem %s3, %s160
      %s162 = smul.u32 8, %s14
      %p163 = scmp.lt.s32.totalorder %s162, 15
      %s164 = scalar_select %p163, %s162, 15
      %s165 = smul.addr %s164, 8
      %s166 = scalar_lea.vmem %s0, %s165
      %s167 = smul.u32 8, %s14
      %s168 = smul.u32 8, %s14
      %p169 = scmp.lt.s32.totalorder %s168, 15
      %s170 = scalar_select %p169, %s168, 15
      %s171 = smul.addr %s170, 8
      %s172 = scalar_lea.vmem %s3, %s171
      %s173 = smul.u32 8, %s14
      %v175 = vld [vmem:[%s166] sm:$0xff]
      %v176 = vld [vmem:[%s166 + $0x8] sm:$0xff]
      %v177 = vld [vmem:[%s166 + $0x10] sm:$0xff]
      %v178 = vld [vmem:[%s166 + $0x18] sm:$0xff]
      %v179 = vld [vmem:[%s166 + $0x20] sm:$0xff]
      %v180 = vld [vmem:[%s166 + $0x28] sm:$0xff]
      %v181 = vld [vmem:[%s166 + $0x30] sm:$0xff]
      %v182 = vld [vmem:[%s166 + $0x38] sm:$0xff]
      %v183 = vpack.c.bf16 %v176, %v175
      %v184 = vpack.c.bf16 %v178, %v177
      %v185 = vpack.c.bf16 %v180, %v179
      %v186 = vpack.c.bf16 %v182, %v181
      %v187 = vld [vmem:[%s1] sm:$0xf]
      %v188 = vld [vmem:[%s1 + $0x4] sm:$0xf]
      %v189 = vld [vmem:[%s1 + $0x8] sm:$0xf]
      %v190 = vld [vmem:[%s1 + $0xc] sm:$0xf]
      %v191 = vld [vmem:[%s2] sm:$0x1]
      %v193 = vlaneseq
      %v194 = vshrl.u32 %v193, 7
      %v195 = vsub.s32 0, %v194
      %v196 = vrot.slane %v191, %v195
      %v202 = vunpack.c.l.b16 %v187
      %v203 = vunpack.c.l.b16 %v188
      %v204 = vunpack.c.l.b16 %v189
      %v205 = vunpack.c.l.b16 %v190
      %v206 = vpack.c.b16 %v203, %v202
      %v207 = vpack.c.b16 %v205, %v204
      %vm210 = vcmask 261120
      %v212 = vsel %vm210, %v183, 0
      %v215 = vsel %vm210, %v184, 0
      %v218 = vsel %vm210, %v185, 0
      %v221 = vsel %vm210, %v186, 0
      %223 = vmatprep.subr.bf16.mxu0 0
      %224 = vmatpush1.bf16.msra.mxu0 0
      %225 = vmatprep.subr.bf16.mxu0 0
      %226 = vmatpush1.bf16.msra.mxu0 0
      %227 = vmatprep.subr.bf16.mxu0 0
      %228 = vmatpush1.bf16.msra.mxu0 0
      %229 = vmatprep.subr.bf16.mxu0 0
      %230 = vmatpush1.bf16.msra.mxu0 0
      %231 = vmatprep.subr.bf16.mxu0 0
      %232 = vmatpush1.bf16.msra.mxu0 0
      %233 = vmatprep.subr.bf16.mxu0 0
      %234 = vmatpush1.bf16.msra.mxu0 0
      %235 = vmatprep.subr.bf16.mxu0 0
      %236 = vmatpush1.bf16.msra.mxu0 %v207
      %237 = vmatprep.subr.bf16.mxu0 0
      %238 = vmatpush1.bf16.msra.mxu0 %v206
      %239 = vmatprep.subr.bf16.mxu0 0
      %240 = vmatpush2.bf16.msra.mxu0 0
      %241 = vmatprep.subr.bf16.mxu0 0
      %242 = vmatpush2.bf16.msra.mxu0 0
      %243 = vmatprep.subr.bf16.mxu0 0
      %244 = vmatpush2.bf16.msra.mxu0 0
      %245 = vmatprep.subr.bf16.mxu0 0
      %246 = vmatpush2.bf16.msra.mxu0 0
      %247 = vmatprep.subr.bf16.mxu0 0
      %248 = vmatpush2.bf16.msra.mxu0 0
      %249 = vmatprep.subr.bf16.mxu0 0
      %250 = vmatpush2.bf16.msra.mxu0 0
      %251 = vmatprep.subr.bf16.mxu0 0
      %252 = vmatpush2.bf16.msra.mxu0 0
      %253 = vmatprep.subr.bf16.mxu0 0
      %254 = vmatpush2.bf16.msra.mxu0 0
      %255 = vmatprep.mubr.bf16.mxu0 0
      %256 = vmatmul.mubr.bf16.gmra.mxu0 %v212
      %v257 = vpop.f32.mrf.mxu0
      %v258 = vadd.f32 %v196, %v257
      %v259 = vpop.f32.mrf.mxu0
      %v260 = vpop.f32.mrf.mxu0
      %v261 = vadd.f32 %v196, %v260
      %v262 = vpop.f32.mrf.mxu0
      %263 = vmatprep.mubr.bf16.mxu0 0
      %264 = vmatmul.mubr.bf16.gmra.mxu0 %v215
      %v265 = vpop.f32.mrf.mxu0
      %v266 = vadd.f32 %v196, %v265
      %v267 = vpop.f32.mrf.mxu0
      %v268 = vpop.f32.mrf.mxu0
      %v269 = vadd.f32 %v196, %v268
      %v270 = vpop.f32.mrf.mxu0
      %271 = vmatprep.mubr.bf16.mxu0 0
      %272 = vmatmul.mubr.bf16.gmra.mxu0 %v218
      %v273 = vpop.f32.mrf.mxu0
      %v274 = vadd.f32 %v196, %v273
      %v275 = vpop.f32.mrf.mxu0
      %v276 = vpop.f32.mrf.mxu0
      %v277 = vadd.f32 %v196, %v276
      %v278 = vpop.f32.mrf.mxu0
      %279 = vmatprep.mubr.bf16.mxu0 0
      %280 = vmatmul.mubr.bf16.gmra.mxu0 %v221
      %v281 = vpop.f32.mrf.mxu0
      %v282 = vadd.f32 %v196, %v281
      %v283 = vpop.f32.mrf.mxu0
      %v284 = vpop.f32.mrf.mxu0
      %v285 = vadd.f32 %v196, %v284
      %v286 = vpop.f32.mrf.mxu0
      %287 = vdwg.mxu0
      %288 = vst [vmem:[%s172] sm:$0xff] %v258
      %289 = vst [vmem:[%s172 + $0x8] sm:$0xff] %v261
      %290 = vst [vmem:[%s172 + $0x10] sm:$0xff] %v266
      %291 = vst [vmem:[%s172 + $0x18] sm:$0xff] %v269
      %292 = vst [vmem:[%s172 + $0x20] sm:$0xff] %v274
      %293 = vst [vmem:[%s172 + $0x28] sm:$0xff] %v277
      %294 = vst [vmem:[%s172 + $0x30] sm:$0xff] %v282
      %295 = vst [vmem:[%s172 + $0x38] sm:$0xff] %v285
      %s296 = smul.u32 8, %s14
      %p297 = scmp.lt.s32.totalorder %s296, 15
      %s298 = scalar_select %p297, %s296, 15
      %s299 = smul.addr %s298, 8
      %s300 = scalar_lea.vmem %s3, %s299
      // Predicated region
      $region33: #{unpatch_embedding_forward.1} parent=31 // pred_check
        %p301 = pneg %p100
      $region34: #{unpatch_embedding_forward.1} parent=31 // pred_check_branch
        %303 = sbr.rel (%p301) target = $region36
      $region35: #{unpatch_embedding_forward.1} parent=31 // pred_region
        %s304 = smul.u32 8, %s14
      $region36: #{unpatch_embedding_forward.1} parent=31 // pred_fallthru
        _
    $region32: #{unpatch_embedding_forward.1} parent=5 // pred_fallthru
      _
    %p305 = scmp.le.s32.totalorder 2, %s9
    // Predicated region
    $region37: #{unpatch_embedding_forward.1} parent=5 // pred_check
      %p306 = pneg %p305
    $region38: #{unpatch_embedding_forward.1} parent=5 // pred_check_branch
      %308 = sbr.rel (%p306) target = $region40
    $region39: #{unpatch_embedding_forward.1} parent=5 // pred_region
      %s309 = ssub.s32 %s9, 2
      // Predicated region
      $region41: #{unpatch_embedding_forward.1} parent=39 // pred_check
        %p310 = pneg %p106
      $region42: #{unpatch_embedding_forward.1} parent=39 // pred_check_branch
        %312 = sbr.rel (%p310) target = $region44
      $region43: #{unpatch_embedding_forward.1} parent=39 // pred_region
        %s313 = smul.u32 8, %s15
        %p314 = scmp.lt.s32.totalorder %s313, 15
        %s315 = scalar_select %p314, %s313, 15
        %s316 = smul.addr %s315, 8
        %s317 = scalar_lea.vmem %s3, %s316
      $region44: #{unpatch_embedding_forward.1} parent=39 // pred_fallthru
        _
    $region40: #{unpatch_embedding_forward.1} parent=5 // pred_fallthru
      _
  $region6: #{unpatch_embedding_forward.1} parent=0 // loop_footer
    %s13 = sadd.s32 1, %s9
  $region7: #{unpatch_embedding_forward.1} parent=0 // loop_footer_branch
    %8 = sbr.rel target = $region3
  $region8: #{unpatch_embedding_forward.1} parent=0 // loop_exit
    _

</llo_original>
